<compile_context>
chip_gen: v6e
topology: v6e:2x2x1
jax: 0.10.0
libtpu: 0.0.40
codegen_flags: <defaults>
</compile_context>

<pallas_src>
import functools
import math

import jax
import jax.numpy as jnp
from jax.experimental import pallas as pl
from jax.experimental.pallas import tpu as pltpu


def _interp_matrix(in_size: int, out_size: int) -> jnp.ndarray:
    """Row-interpolation matrix M (out_size, in_size) for align_corners=True bilinear."""
    if out_size == 1:
        src = jnp.zeros((1,), dtype=jnp.float32)
    else:
        src = jnp.arange(out_size, dtype=jnp.float32) * (
            (in_size - 1) / (out_size - 1)
        )
    lo = jnp.floor(src).astype(jnp.int32)
    hi = jnp.minimum(lo + 1, in_size - 1)
    frac = src - lo.astype(jnp.float32)
    rows = jnp.arange(out_size)
    m = jnp.zeros((out_size, in_size), dtype=jnp.float32)
    m = m.at[rows, lo].add(1.0 - frac)
    m = m.at[rows, hi].add(frac)
    return m


def _choose_plane_batch(nc: int, h: int, w: int, ow: int, itemsize: int):
    """Pick B = planes folded into the lane dim per grid step (and minimal b0).

    Constraints / goals:
      * B is a multiple of b0 so that B*W and B*OW are multiples of 128 (lane tiling).
      * Minimize padding waste (padded planes are DMA'd and computed for nothing).
      * Keep >= 2-3 plane steps when enough planes exist (pipelining, v7x megacore).
      * Target ~0.75 MiB input slabs per step; prefer output lane width >= 512.
    """
    b0_w = 128 // math.gcd(w, 128)
    b0_ow = 128 // math.gcd(ow, 128)
    b0 = (b0_w * b0_ow) // math.gcd(b0_w, b0_ow)      # minimal legal plane batch
    max_groups = -(-nc // b0)                          # never exceed one padded copy
    slab_groups = max(1, (768 * 1024) // max(1, b0 * h * w * itemsize))
    steps_groups = max(1, max_groups // 3) if max_groups >= 3 else 1
    cap = max(1, min(max_groups, slab_groups, steps_groups))

    best_key, best_b = None, b0
    for g in range(1, cap + 1):
        b = g * b0
        pad = -(-nc // b) * b - nc
        key = (pad, 0 if b * ow >= 512 else 1, -b)     # min pad, prefer wide, prefer big
        if best_key is None or key < best_key:
            best_key, best_b = key, b
    return best_b, b0


def _choose_oh_tile(oh: int, plane_steps: int, b: int, w: int) -> int:
    """OH tile: a multiple of 8 dividing OH (or OH itself).

    Bounds the (toh, B*W) f32 intermediate and, when the plane axis has a single
    step, forces >= 2 total grid steps so the pipeline (and second TensorCore on
    v7x) has work.
    """
    if oh % 8 != 0:
        return oh                                      # block must equal the full dim
    cap = min(512, max(8, (1 << 20) // max(1, 4 * b * w)))
    if plane_steps == 1 and oh >= 16:
        cap = min(cap, oh // 2)
    divs = [t for t in range(8, oh + 1, 8) if oh % t == 0 and t <= cap]
    return max(divs) if divs else oh


def _interp_kernel(a_h_ref, a_wg_ref, x_ref, o_ref, *, groups, g_w, g_ow):
    # a_h_ref:  (toh, H)          row-interpolation weights (f32, resident per OH tile)
    # a_wg_ref: (b0*W, b0*OW)     minimal block-diagonal column weights I_{b0} (x) A_w^T (f32)
    # x_ref:    (H, B*W)          B planes folded into the lane dimension
    # o_ref:    (toh, B*OW)
    x = x_ref[...]
    if x.dtype != jnp.float32:
        x = x.astype(jnp.float32)     # keep the interpolation in f32 (weights not bf16-exact)
    # Row interpolation: one dense MXU matmul over the whole lane-folded slab.
    tmp = jnp.dot(a_h_ref[...], x, preferred_element_type=jnp.float32)   # (toh, B*W) f32
    # Column interpolation: static lane-aligned slices (starts are multiples of 128)
    # against the minimal block-diagonal weight -> no redundant MXU FLOPs, no B^2 weight.
    for j in range(groups):
        seg = tmp[:, j * g_w:(j + 1) * g_w]
        out = jnp.dot(seg, a_wg_ref[...], preferred_element_type=jnp.float32)
        o_ref[:, j * g_ow:(j + 1) * g_ow] = out.astype(o_ref.dtype)


def interpolation_block(
    x: jnp.ndarray,
    scale_factor: int | None = 2,
    out_size: tuple[int, int] | None = None,
    mode: str = "bilinear",
    align_corners: bool | None = True,
    up: bool = True,
    size: tuple[int, int] | None = None,
) -> jnp.ndarray:
    """Pallas equivalent of InterpolationBlock.forward (bilinear, align_corners=True)."""
    assert mode == "bilinear", "only bilinear mode is implemented"
    assert align_corners is True, "only align_corners=True is implemented"

    n, c, h, w = x.shape
    if size is not None:
        oh, ow = size
    elif out_size is not None:
        oh, ow = out_size
    elif up:
        oh, ow = h * scale_factor, w * scale_factor
    else:
        oh, ow = h // scale_factor, w // scale_factor

    nc = n * c
    itemsize = jnp.dtype(x.dtype).itemsize
    b, b0 = _choose_plane_batch(nc, h, w, ow, itemsize)
    nc_pad = -(-nc // b) * b
    plane_steps = nc_pad // b
    toh = _choose_oh_tile(oh, plane_steps, b, w)
    oh_steps = oh // toh

    groups = b // b0
    g_w, g_ow = b0 * w, b0 * ow

    # Interpolation weights: always f32 (correctness), cast to output dtype only at store.
    a_h = _interp_matrix(h, oh)                                      # (OH, H)
    a_w_t = _interp_matrix(w, ow).T                                  # (W, OW)
    a_wg = jnp.kron(jnp.eye(b0, dtype=jnp.float32), a_w_t)           # (b0*W, b0*OW), minimal block

    # (N, C, H, W) -> (H, NC_pad*W): fold the plane batch into the lane dimension.
    x_flat = x.reshape(nc, h, w)
    if nc_pad != nc:
        x_flat = jnp.pad(x_flat, ((0, nc_pad - nc), (0, 0), (0, 0)))
    x2d = x_flat.transpose(1, 0, 2).reshape(h, nc_pad * w)

    # Resident weights: single-buffered (constant block index -> no useless double buffer).
    if oh_steps == 1:
        a_h_spec = pl.BlockSpec((toh, h), lambda i, r: (0, 0),
                                pipeline_mode=pl.Buffered(1))
    else:
        a_h_spec = pl.BlockSpec((toh, h), lambda i, r: (r, 0))
    a_wg_spec = pl.BlockSpec((g_w, g_ow), lambda i, r: (0, 0),
                             pipeline_mode=pl.Buffered(1))
    x_spec = pl.BlockSpec((h, b * w), lambda i, r: (0, i))            # constant along r (resident)
    o_spec = pl.BlockSpec((toh, b * ow), lambda i, r: (r, i))         # lane-dense output slab

    # Scoped-VMEM budget from the actual footprint (+2x headroom), capped for v7x (64 MiB).
    est = (2 * h * b * w * itemsize                 # double-buffered input slab
           + 2 * toh * b * ow * itemsize            # double-buffered output slab
           + toh * h * 4 + g_w * g_ow * 4           # resident f32 weights
           + toh * b * w * 4 + toh * g_ow * 4)      # f32 intermediate + one output group
    vmem_limit = int(min(64 * (1 << 20), max(32 * (1 << 20), 2 * est)))

    kernel = functools.partial(_interp_kernel, groups=groups, g_w=g_w, g_ow=g_ow)

    out2d = pl.pallas_call(
        kernel,
        out_shape=jax.ShapeDtypeStruct((oh, nc_pad * ow), x.dtype),
        grid_spec=pltpu.PrefetchScalarGridSpec(
            num_scalar_prefetch=0,
            grid=(plane_steps, oh_steps),            # both axes independent ("parallel")
            in_specs=[a_h_spec, a_wg_spec, x_spec],
            out_specs=o_spec,
        ),
        compiler_params=pltpu.CompilerParams(
            dimension_semantics=("parallel", "parallel"),
            vmem_limit_bytes=vmem_limit,
        ),
    )(a_h, a_wg, x2d)

    out = out2d.reshape(oh, nc_pad, ow).transpose(1, 0, 2)[:nc]
    return out.reshape(n, c, oh, ow)


if __name__ == "__main__":
    key = jax.random.PRNGKey(0)

    # Primary example: NCHW feature map, 2x bilinear upsample (align_corners=True).
    x = jax.random.normal(key, (2, 4, 16, 16), dtype=jnp.float32)
    y = interpolation_block(x, scale_factor=2, mode="bilinear",
                            align_corners=True, up=True)
    y = jax.block_until_ready(y)
    assert y.shape == (2, 4, 32, 32)

    a_h = _interp_matrix(16, 32)
    a_w = _interp_matrix(16, 32)
    y_ref = jnp.einsum("oh,nchw,pw->ncop", a_h, x, a_w)
    assert jnp.allclose(y, y_ref, atol=1e-5, rtol=1e-5)

    # Padded-plane path (nc not a multiple of the minimal lane batch).
    x2 = jax.random.normal(jax.random.PRNGKey(1), (1, 3, 16, 16), dtype=jnp.float32)
    y2 = jax.block_until_ready(interpolation_block(x2, scale_factor=2))
    y2_ref = jnp.einsum("oh,nchw,pw->ncop", a_h, x2, a_w)
    assert y2.shape == (1, 3, 32, 32)
    assert jnp.allclose(y2, y2_ref, atol=1e-5, rtol=1e-5)

    # Multi-group path (B > b0 -> lane-sliced second matmul, several plane steps).
    x3 = jax.random.normal(jax.random.PRNGKey(2), (8, 8, 16, 16), dtype=jnp.float32)
    y3 = jax.block_until_ready(interpolation_block(x3, scale_factor=2))
    y3_ref = jnp.einsum("oh,nchw,pw->ncop", a_h, x3, a_w)
    assert y3.shape == (8, 8, 32, 32)
    assert jnp.allclose(y3, y3_ref, atol=1e-5, rtol=1e-5)

    print("KERNEL_OK")
</pallas_src>

<mosaic_0001>
module attributes {stable_mosaic.version = 11 : i64} {
  func.func @_interp_kernel(%arg0: i32, %arg1: i32, %arg2: memref<16x16xf32, #tpu.memory_space<vmem>>, %arg3: memref<128x256xf32, #tpu.memory_space<vmem>>, %arg4: memref<16x128xf32, #tpu.memory_space<vmem>>, %arg5: memref<16x256xf32, #tpu.memory_space<vmem>>) attributes {dimension_semantics = [#tpu.dimension_semantics<parallel>, #tpu.dimension_semantics<parallel>], iteration_bounds = array<i64: 1, 2>, scalar_prefetch = 0 : i64, scratch_operands = 0 : i64, tpu.core_type = #tpu.core_type<tc>, window_params = [{transform_indices = @transform_0, window_bounds = array<i64: 16, 16>}, {pipeline_mode = #tpu.pipeline_mode<synchronous>, transform_indices = @transform_1, window_bounds = array<i64: 128, 256>}, {transform_indices = @transform_2, window_bounds = array<i64: 16, 128>}, {transform_indices = @transform_3, window_bounds = array<i64: 16, 256>}]} {
    %c0 = arith.constant 0 : index
    %c0_0 = arith.constant 0 : index
    %0 = vector.load %arg4[%c0, %c0_0] : memref<16x128xf32, #tpu.memory_space<vmem>>, vector<16x128xf32>
    %c0_1 = arith.constant 0 : index
    %c0_2 = arith.constant 0 : index
    %1 = vector.load %arg2[%c0_1, %c0_2] : memref<16x16xf32, #tpu.memory_space<vmem>>, vector<16x16xf32>
    %cst = arith.constant dense<0.000000e+00> : vector<16x128xf32>
    %2 = tpu.matmul %1, %0, %cst {dimension_numbers = #tpu.dot_dimension_numbers<[1], [0], [0], [1], [0, 0, 1, 1], [], []>} : vector<16x16xf32>, vector<16x128xf32>, vector<16x128xf32> -> vector<16x128xf32>
    %c0_3 = arith.constant 0 : index
    %c0_4 = arith.constant 0 : index
    %3 = vector.load %arg3[%c0_3, %c0_4] : memref<128x256xf32, #tpu.memory_space<vmem>>, vector<128x256xf32>
    %cst_5 = arith.constant dense<0.000000e+00> : vector<16x256xf32>
    %4 = tpu.matmul %2, %3, %cst_5 {dimension_numbers = #tpu.dot_dimension_numbers<[1], [0], [0], [1], [0, 0, 1, 1], [], []>} : vector<16x128xf32>, vector<128x256xf32>, vector<16x256xf32> -> vector<16x256xf32>
    %c0_6 = arith.constant 0 : index
    %c0_7 = arith.constant 0 : index
    %5 = vector.load %arg5[%c0_6, %c0_7] : memref<16x256xf32, #tpu.memory_space<vmem>>, vector<16x256xf32>
    tpu.vector_store %arg5[%c0_6, %c0_7], %4 {strides = array<i32>} : memref<16x256xf32, #tpu.memory_space<vmem>>, vector<16x256xf32>,
    return
  }
  func.func @transform_0(%arg0: i32, %arg1: i32) -> (i32, i32) {
    %c0_i32 = arith.constant 0 : i32
    %c0_i32_0 = arith.constant 0 : i32
    return %arg1, %c0_i32 : i32, i32
  }
  func.func @transform_1(%arg0: i32, %arg1: i32) -> (i32, i32) {
    %c0_i32 = arith.constant 0 : i32
    %c0_i32_0 = arith.constant 0 : i32
    %c0_i32_1 = arith.constant 0 : i32
    return %c0_i32, %c0_i32_0 : i32, i32
  }
  func.func @transform_2(%arg0: i32, %arg1: i32) -> (i32, i32) {
    %c0_i32 = arith.constant 0 : i32
    %c0_i32_0 = arith.constant 0 : i32
    return %c0_i32, %arg0 : i32, i32
  }
  func.func @transform_3(%arg0: i32, %arg1: i32) -> (i32, i32) {
    %c0_i32 = arith.constant 0 : i32
    return %arg1, %arg0 : i32, i32
  }
}

</mosaic_0001>

<llo_original>
// kernel: tpu_custom_call.1
$region0: #{tpu_custom_call.1}
  #allocation0 [shape = 'u32[]', space=smem, size = 0x4, offset = 0x4, fixed_abs, tag = 'smem constant byte address 0x4 - core index']
  #allocation1 [shape = 'u32[144,128]{1,0:T(1,128)}', space=vmem, size = 0x12000, scoped, tag = 'internal scratch']
  %s0 = inlined_call_operand.vmem [shape: f32[32,16], index: 0, kind: input, shape index: {}]
  %s1 = inlined_call_operand.hbm [shape: f32[128,256], index: 1, kind: input, shape index: {}]
  %s2 = inlined_call_operand.vmem [shape: f32[16,128], index: 2, kind: input, shape index: {}]
  %s3 = inlined_call_operand.hbm [shape: f32[32,256], index: 3, kind: output, shape index: {}]
  %s4 = sld [smem:[#allocation0]]
  $region49: #{tpu_custom_call.1} parent=0
    _
  %s6 = ssub.s32 1, %s4
  %s7 = scalar_select 0, %s6, %s4
  $region1: #{tpu_custom_call.1} parent=0
    #allocation2 [shape = 'u8[131072]{0}', space=vmem, size = 0x20000, scoped, tag = 'input window, operand 1, single buffered']
    #allocation3 [shape = 's32[2]{0}', space=sflag, size = 0x8, scoped, tag = 'scoped memory for tpu_custom_call.1']
    #allocation4 [shape = 's32[2]{0}', space=sflag, size = 0x8, scoped, tag = 'scoped memory for tpu_custom_call.1']
    #allocation5 [shape = 'u8[32768]{0}', space=vmem, size = 0x8000, scoped, tag = 'output window, operand 0']
    %8 = vsyncpa [#allocation3], 0
    %9 = vsyncpa [#allocation4], 0
    %s10 = scalar_lea.sflag [#allocation4], 1
    %11 = vsyncpa %s10, 0
    loop: start=0, step=1, limit=4
    $region2: #{tpu_custom_call.1} parent=1 // loop_pre_header
      _
    $region3: #{tpu_custom_call.1} parent=1 // loop_header
      %s13 = sphi 0, %s17
      %p14 = scmp.ge.s32.totalorder %s13, 4
      %s20 = sphi 0, %s32
      %s21 = sphi 0, %s28
      %s22 = sphi 0, %s20
      %s23 = sphi 0, %s21
      %s24 = sphi 0, %s22
      %s25 = sphi 0, %s23
      %s35 = sphi 0, %s37
      %s38 = sphi 0, %s35
      %s39 = sphi 0, %s38
      %s55 = sphi 0, %s39
      %s59 = sphi 0, %s59
      %s61 = sphi 0, %s59
      %s62 = sphi 0, %s61
      %s76 = sphi 0, %s62
      %s82 = sphi 0, %s84
      %s85 = sphi 0, %s82
      %s86 = sphi 0, %s85
      %s102 = sphi 0, %s86
      %s110 = sphi 0, %s112
      %s113 = sphi 0, %s110
      %s114 = sphi 0, %s113
      %s130 = sphi 0, %s114
    $region4: #{tpu_custom_call.1} parent=1 // loop_header_branch
      %16 = sbr.rel (%p14) target = $region8
    $region5: #{tpu_custom_call.1} parent=1 // loop_body
      %s18 = ssub.s32 %s13, 1
      %s19 = ssub.s32 %s13, 2
      %s26 = sadd.s32 1, %s21
      %p27 = scmp.ge.s32.totalorder %s26, 2
      %s28 = scalar_select %p27, 0, %s26
      %s29 = sadd.s32 1, %s20
      %s30 = scalar_select %p27, %s29, %s20
      %p31 = scmp.ge.s32.totalorder %s30, 1
      %s32 = scalar_select %p31, 0, %s30
      %s33 = ssub.s32 %s21, %s28
      %p34 = scmp.eq.s32.totalorder %s33, 0
      %s36 = sadd.s32 %s35, 1
      %s37 = scalar_select %p34, %s35, %s36
      %p40 = pneg %p34
      %p41 = scmp.eq.s32.totalorder %s13, 1
      %p42 = por %p40, %p41
      %p43 = scmp.ne.s32.totalorder %s35, %s38
      %p44 = scmp.eq.s32.totalorder %s13, 0
      %p45 = por %p43, %p44
      %p46 = scmp.ne.s32.totalorder %s35, %s38
      %p47 = scmp.eq.s32.totalorder %s18, 1
      %p48 = por %p46, %p47
      %p49 = scmp.ne.s32.totalorder %s38, %s39
      %p50 = scmp.eq.s32.totalorder %s18, 0
      %p51 = por %p49, %p50
      %p52 = scmp.ne.s32.totalorder %s38, %s39
      %p53 = scmp.eq.s32.totalorder %s19, 1
      %p54 = por %p52, %p53
      %p56 = scmp.ne.s32.totalorder %s39, %s55
      %p57 = scmp.eq.s32.totalorder %s19, 0
      %p58 = por %p56, %p57
      %s60 = sadd.s32 %s59, 1
      %p63 = scmp.eq.s32.totalorder %s13, 1
      %p64 = scmp.ne.s32.totalorder %s59, %s61
      %p65 = scmp.eq.s32.totalorder %s13, 0
      %p66 = por %p64, %p65
      %p67 = scmp.ne.s32.totalorder %s59, %s61
      %p68 = scmp.eq.s32.totalorder %s18, 1
      %p69 = por %p67, %p68
      %p70 = scmp.ne.s32.totalorder %s61, %s62
      %p71 = scmp.eq.s32.totalorder %s18, 0
      %p72 = por %p70, %p71
      %p73 = scmp.ne.s32.totalorder %s61, %s62
      %p74 = scmp.eq.s32.totalorder %s19, 1
      %p75 = por %p73, %p74
      %p77 = scmp.ne.s32.totalorder %s62, %s76
      %p78 = scmp.eq.s32.totalorder %s19, 0
      %p79 = por %p77, %p78
      %s80 = ssub.s32 %s20, %s32
      %p81 = scmp.eq.s32.totalorder %s80, 0
      %s83 = sadd.s32 %s82, 1
      %s84 = scalar_select %p81, %s82, %s83
      %p87 = pneg %p81
      %p88 = scmp.eq.s32.totalorder %s13, 1
      %p89 = por %p87, %p88
      %p90 = scmp.ne.s32.totalorder %s82, %s85
      %p91 = scmp.eq.s32.totalorder %s13, 0
      %p92 = por %p90, %p91
      %p93 = scmp.ne.s32.totalorder %s82, %s85
      %p94 = scmp.eq.s32.totalorder %s18, 1
      %p95 = por %p93, %p94
      %p96 = scmp.ne.s32.totalorder %s85, %s86
      %p97 = scmp.eq.s32.totalorder %s18, 0
      %p98 = por %p96, %p97
      %p99 = scmp.ne.s32.totalorder %s85, %s86
      %p100 = scmp.eq.s32.totalorder %s19, 1
      %p101 = por %p99, %p100
      %p103 = scmp.ne.s32.totalorder %s86, %s102
      %p104 = scmp.eq.s32.totalorder %s19, 0
      %p105 = por %p103, %p104
      %s106 = ssub.s32 %s21, %s28
      %s107 = ssub.s32 %s20, %s32
      %s108 = sor.u32 %s106, %s107
      %p109 = scmp.eq.s32.totalorder %s108, 0
      %s111 = sadd.s32 %s110, 1
      %s112 = scalar_select %p109, %s110, %s111
      %p115 = pneg %p109
      %p116 = scmp.eq.s32.totalorder %s13, 1
      %p117 = por %p115, %p116
      %p118 = scmp.ne.s32.totalorder %s110, %s113
      %p119 = scmp.eq.s32.totalorder %s13, 0
      %p120 = por %p118, %p119
      %p121 = scmp.ne.s32.totalorder %s110, %s113
      %p122 = scmp.eq.s32.totalorder %s18, 1
      %p123 = por %p121, %p122
      %p124 = scmp.ne.s32.totalorder %s113, %s114
      %p125 = scmp.eq.s32.totalorder %s18, 0
      %p126 = por %p124, %p125
      %p127 = scmp.ne.s32.totalorder %s113, %s114
      %p128 = scmp.eq.s32.totalorder %s19, 1
      %p129 = por %p127, %p128
      %p131 = scmp.ne.s32.totalorder %s114, %s130
      %p132 = scmp.eq.s32.totalorder %s19, 0
      %p133 = por %p131, %p132
      %p134 = scmp.le.s32.totalorder 1, %s13
      %p135 = scmp.lt.s32.totalorder %s13, 3
      %p136 = pnand %p134, %p135
      %p137 = pneg %p136
      // Predicated region
      $region9: #{tpu_custom_call.1} parent=5 // pred_check
        _
      $region10: #{tpu_custom_call.1} parent=5 // pred_check_branch
        %139 = sbr.rel (%p136) target = $region12
      $region11: #{tpu_custom_call.1} parent=5 // pred_region
        %s140 = ssub.s32 %s13, 1
        // Predicated region
        $region13: #{tpu_custom_call.1} parent=11 // pred_check
          %p141 = pneg %p72
        $region14: #{tpu_custom_call.1} parent=11 // pred_check_branch
          %143 = sbr.rel (%p141) target = $region16
        $region15: #{tpu_custom_call.1} parent=11 // pred_region
          %s145 = ssub.s32 4096, 4096
          %146 = vsyncadd [#allocation3], %s145
          %s147 = sshll.u32 [#allocation2], 4
          %s148 = int_to_ptr.vmem [resolvable:$true] %s147
          %153 = dma.hbm_to_vmem [thread:$0]  %s1, 4096, %s148, [#allocation3], 256, 256, 16
        $region16: #{tpu_custom_call.1} parent=11 // pred_fallthru
          _
        // Predicated region
        $region17: #{tpu_custom_call.1} parent=11 // pred_check
          %p154 = pneg %p98
        $region18: #{tpu_custom_call.1} parent=11 // pred_check_branch
          %156 = sbr.rel (%p154) target = $region20
        $region19: #{tpu_custom_call.1} parent=11 // pred_region
          %p157 = scmp.lt.s32.totalorder %s22, 0
          %s158 = scalar_select %p157, %s22, 0
          %s159 = smul.addr %s158, 8
          %s160 = scalar_lea.vmem %s2, %s159
        $region20: #{tpu_custom_call.1} parent=11 // pred_fallthru
          _
      $region12: #{tpu_custom_call.1} parent=5 // pred_fallthru
        _
      %p161 = scmp.lt.s32.totalorder %s13, 2
      // Predicated region
      $region21: #{tpu_custom_call.1} parent=5 // pred_check
        %p162 = pneg %p161
      $region22: #{tpu_custom_call.1} parent=5 // pred_check_branch
        %164 = sbr.rel (%p162) target = $region24
      $region23: #{tpu_custom_call.1} parent=5 // pred_region
        // Predicated region
        $region25: #{tpu_custom_call.1} parent=23 // pred_check
          %p165 = pneg %p45
        $region26: #{tpu_custom_call.1} parent=23 // pred_check_branch
          %167 = sbr.rel (%p165) target = $region28
        $region27: #{tpu_custom_call.1} parent=23 // pred_region
          %s168 = smul.u32 2, %s21
          %p169 = scmp.lt.s32.totalorder %s168, 3
          %s170 = scalar_select %p169, %s168, 3
          %s171 = smul.addr %s170, 8
          %s172 = scalar_lea.vmem %s0, %s171
          %s173 = smul.u32 2, %s21
        $region28: #{tpu_custom_call.1} parent=23 // pred_fallthru
          _
      $region24: #{tpu_custom_call.1} parent=5 // pred_fallthru
        _
      %p174 = scmp.le.s32.totalorder 1, %s13
      %p175 = scmp.lt.s32.totalorder %s13, 3
      %p176 = pnand %p174, %p175
      %p177 = pneg %p176
      // Predicated region
      $region29: #{tpu_custom_call.1} parent=5 // pred_check
        _
      $region30: #{tpu_custom_call.1} parent=5 // pred_check_branch
        %179 = sbr.rel (%p176) target = $region32
      $region31: #{tpu_custom_call.1} parent=5 // pred_region
        %s180 = ssub.s32 %s13, 1
        // Predicated region
        $region33: #{tpu_custom_call.1} parent=31 // pred_check
          %p181 = pneg %p72
        $region34: #{tpu_custom_call.1} parent=31 // pred_check_branch
          %183 = sbr.rel (%p181) target = $region36
        $region35: #{tpu_custom_call.1} parent=31 // pred_region
          %184 = dma.done [#allocation3], 4096
        $region36: #{tpu_custom_call.1} parent=31 // pred_fallthru
          _
        %s185 = smul.u32 2, %s23
        %p186 = scmp.lt.s32.totalorder %s185, 3
        %s187 = scalar_select %p186, %s185, 3
        %s188 = smul.addr %s187, 8
        %s189 = scalar_lea.vmem %s0, %s188
        %p190 = pneg %p51
        %p191 = pneg %p48
        %p192 = pneg %p72
        %p193 = pneg %p69
        %p194 = scmp.lt.s32.totalorder %s22, 0
        %s195 = scalar_select %p194, %s22, 0
        %s196 = smul.addr %s195, 8
        %s197 = scalar_lea.vmem %s2, %s196
        %p198 = pneg %p98
        %p199 = pneg %p95
        %p200 = pneg %p126
        %p201 = pneg %p123
        %s202 = sand.u32 %s113, 1
        %s203 = scalar_lea.sflag [#allocation4], %s202
        %s204 = sand.u32 %s113, 1
        %s205 = smul.addr %s204, 32
        %s206 = scalar_lea.vmem [#allocation5], %s205
        %s207 = smul.u32 2, %s23
        %p208 = scmp.lt.s32.totalorder %s207, 3
        %s209 = scalar_select %p208, %s207, 3
        %s210 = smul.addr %s209, 8
        %s211 = scalar_lea.vmem %s0, %s210
        %s212 = smul.u32 2, %s23
        %p213 = scmp.lt.s32.totalorder %s22, 0
        %s214 = scalar_select %p213, %s22, 0
        %s215 = smul.addr %s214, 8
        %s216 = scalar_lea.vmem %s2, %s215
        %s217 = smul.u32 2, %s23
        %s218 = smul.u32 2, %s22
        %v219 = vld [vmem:[%s216] sm:$0xff]
        %v220 = vld [vmem:[%s216 + $0x8] sm:$0xff]
        %v221 = vld [vmem:[%s211] sm:$0xff]
        %v222 = vld [vmem:[%s211 + $0x8] sm:$0xff]
        %vm223 = vcmask 130048
        %v225 = vsel %vm223, %v221, 0
        %v228 = vsel %vm223, %v222, 0
        %230 = vmatprep.subr.mxu0 0.0
        %231 = vmatpush1.msra.mxu0 0.0
        %232 = vmatprep.subr.mxu0 0.0
        %233 = vmatpush1.msra.mxu0 0.0
        %234 = vmatprep.subr.mxu0 0.0
        %235 = vmatpush1.msra.mxu0 0.0
        %236 = vmatprep.subr.mxu0 0.0
        %237 = vmatpush1.msra.mxu0 0.0
        %238 = vmatprep.subr.mxu0 0.0
        %239 = vmatpush1.msra.mxu0 0.0
        %240 = vmatprep.subr.mxu0 0.0
        %241 = vmatpush1.msra.mxu0 0.0
        %242 = vmatprep.subr.mxu0 0.0
        %243 = vmatpush1.msra.mxu0 0.0
        %244 = vmatprep.subr.mxu0 0.0
        %245 = vmatpush1.msra.mxu0 0.0
        %246 = vmatprep.subr.mxu0 0.0
        %247 = vmatpush1.msra.mxu0 0.0
        %248 = vmatprep.subr.mxu0 0.0
        %249 = vmatpush1.msra.mxu0 0.0
        %250 = vmatprep.subr.mxu0 0.0
        %251 = vmatpush1.msra.mxu0 0.0
        %252 = vmatprep.subr.mxu0 0.0
        %253 = vmatpush1.msra.mxu0 0.0
        %254 = vmatprep.subr.mxu0 0.0
        %255 = vmatpush1.msra.mxu0 0.0
        %256 = vmatprep.subr.mxu0 0.0
        %257 = vmatpush1.msra.mxu0 0.0
        %258 = vmatprep.subr.mxu0 0.0
        %259 = vmatpush1.msra.mxu0 %v220
        %260 = vmatprep.subr.mxu0 0.0
        %261 = vmatpush1.msra.mxu0 %v219
        %262 = vmatprep.subr.mxu0 0.0
        %263 = vmatpush2.msra.mxu0 0.0
        %264 = vmatprep.subr.mxu0 0.0
        %265 = vmatpush2.msra.mxu0 0.0
        %266 = vmatprep.subr.mxu0 0.0
        %267 = vmatpush2.msra.mxu0 0.0
        %268 = vmatprep.subr.mxu0 0.0
        %269 = vmatpush2.msra.mxu0 0.0
        %270 = vmatprep.subr.mxu0 0.0
        %271 = vmatpush2.msra.mxu0 0.0
        %272 = vmatprep.subr.mxu0 0.0
        %273 = vmatpush2.msra.mxu0 0.0
        %274 = vmatprep.subr.mxu0 0.0
        %275 = vmatpush2.msra.mxu0 0.0
        %276 = vmatprep.subr.mxu0 0.0
        %277 = vmatpush2.msra.mxu0 0.0
        %278 = vmatprep.subr.mxu0 0.0
        %279 = vmatpush2.msra.mxu0 0.0
        %280 = vmatprep.subr.mxu0 0.0
        %281 = vmatpush2.msra.mxu0 0.0
        %282 = vmatprep.subr.mxu0 0.0
        %283 = vmatpush2.msra.mxu0 0.0
        %284 = vmatprep.subr.mxu0 0.0
        %285 = vmatpush2.msra.mxu0 0.0
        %286 = vmatprep.subr.mxu0 0.0
        %287 = vmatpush2.msra.mxu0 0.0
        %288 = vmatprep.subr.mxu0 0.0
        %289 = vmatpush2.msra.mxu0 0.0
        %290 = vmatprep.subr.mxu0 0.0
        %291 = vmatpush2.msra.mxu0 0.0
        %292 = vmatprep.subr.mxu0 0.0
        %293 = vmatpush2.msra.mxu0 0.0
        %294 = vmatprep.mubr.f32.mxu0 0.0
        %295 = vmatmul.mubr.f32.gmra.mxu0 %v225
        %v296 = vpop.f32.mrf.mxu0
        %v297 = vadd.f32 0.0, %v296
        %v298 = vpop.f32.mrf.mxu0
        %299 = vmatprep.mubr.f32.mxu0 0.0
        %300 = vmatmul.mubr.f32.gmra.mxu0 %v228
        %v301 = vpop.f32.mrf.mxu0
        %v302 = vadd.f32 0.0, %v301
        %v303 = vpop.f32.mrf.mxu0
        %304 = vdwg.mxu0
        %v305 = vld [vmem:[#allocation2] sm:$0xff]
        %v306 = vld [vmem:[#allocation2 + $0x8] sm:$0xff]
        %v307 = vld [vmem:[#allocation2 + $0x10] sm:$0xff]
        %v308 = vld [vmem:[#allocation2 + $0x18] sm:$0xff]
        %v309 = vld [vmem:[#allocation2 + $0x20] sm:$0xff]
        %v310 = vld [vmem:[#allocation2 + $0x28] sm:$0xff]
        %v311 = vld [vmem:[#allocation2 + $0x30] sm:$0xff]
        %v312 = vld [vmem:[#allocation2 + $0x38] sm:$0xff]
        %v313 = vld [vmem:[#allocation2 + $0x40] sm:$0xff]
        %v314 = vld [vmem:[#allocation2 + $0x48] sm:$0xff]
        %v315 = vld [vmem:[#allocation2 + $0x50] sm:$0xff]
        %v316 = vld [vmem:[#allocation2 + $0x58] sm:$0xff]
        %v317 = vld [vmem:[#allocation2 + $0x60] sm:$0xff]
        %v318 = vld [vmem:[#allocation2 + $0x68] sm:$0xff]
        %v319 = vld [vmem:[#allocation2 + $0x70] sm:$0xff]
        %v320 = vld [vmem:[#allocation2 + $0x78] sm:$0xff]
        %v321 = vld [vmem:[#allocation2 + $0x80] sm:$0xff]
        %v322 = vld [vmem:[#allocation2 + $0x88] sm:$0xff]
        %v323 = vld [vmem:[#allocation2 + $0x90] sm:$0xff]
        %v324 = vld [vmem:[#allocation2 + $0x98] sm:$0xff]
        %v325 = vld [vmem:[#allocation2 + $0xa0] sm:$0xff]
        %v326 = vld [vmem:[#allocation2 + $0xa8] sm:$0xff]
        %v327 = vld [vmem:[#allocation2 + $0xb0] sm:$0xff]
        %v328 = vld [vmem:[#allocation2 + $0xb8] sm:$0xff]
        %v329 = vld [vmem:[#allocation2 + $0xc0] sm:$0xff]
        %v330 = vld [vmem:[#allocation2 + $0xc8] sm:$0xff]
        %v331 = vld [vmem:[#allocation2 + $0xd0] sm:$0xff]
        %v332 = vld [vmem:[#allocation2 + $0xd8] sm:$0xff]
        %v333 = vld [vmem:[#allocation2 + $0xe0] sm:$0xff]
        %v334 = vld [vmem:[#allocation2 + $0xe8] sm:$0xff]
        %v335 = vld [vmem:[#allocation2 + $0xf0] sm:$0xff]
        %v336 = vld [vmem:[#allocation2 + $0xf8] sm:$0xff]
        %337 = vmatprep.subr.mxu0 %v336
        %338 = vmatpush1.msra.mxu0 %v335
        %339 = vmatprep.subr.mxu0 %v334
        %340 = vmatpush1.msra.mxu0 %v333
        %341 = vmatprep.subr.mxu0 %v332
        %342 = vmatpush1.msra.mxu0 %v331
        %343 = vmatprep.subr.mxu0 %v330
        %344 = vmatpush1.msra.mxu0 %v329
        %345 = vmatprep.subr.mxu0 %v328
        %346 = vmatpush1.msra.mxu0 %v327
        %347 = vmatprep.subr.mxu0 %v326
        %348 = vmatpush1.msra.mxu0 %v325
        %349 = vmatprep.subr.mxu0 %v324
        %350 = vmatpush1.msra.mxu0 %v323
        %351 = vmatprep.subr.mxu0 %v322
        %352 = vmatpush1.msra.mxu0 %v321
        %353 = vmatprep.subr.mxu0 %v320
        %354 = vmatpush1.msra.mxu0 %v319
        %355 = vmatprep.subr.mxu0 %v318
        %356 = vmatpush1.msra.mxu0 %v317
        %357 = vmatprep.subr.mxu0 %v316
        %358 = vmatpush1.msra.mxu0 %v315
        %359 = vmatprep.subr.mxu0 %v314
        %360 = vmatpush1.msra.mxu0 %v313
        %361 = vmatprep.subr.mxu0 %v312
        %362 = vmatpush1.msra.mxu0 %v311
        %363 = vmatprep.subr.mxu0 %v310
        %364 = vmatpush1.msra.mxu0 %v309
        %365 = vmatprep.subr.mxu0 %v308
        %366 = vmatpush1.msra.mxu0 %v307
        %367 = vmatprep.subr.mxu0 %v306
        %368 = vmatpush1.msra.mxu0 %v305
        %369 = vmatprep.subr.mxu0 0.0
        %370 = vmatpush2.msra.mxu0 0.0
        %371 = vmatprep.subr.mxu0 0.0
        %372 = vmatpush2.msra.mxu0 0.0
        %373 = vmatprep.subr.mxu0 0.0
        %374 = vmatpush2.msra.mxu0 0.0
        %375 = vmatprep.subr.mxu0 0.0
        %376 = vmatpush2.msra.mxu0 0.0
        %377 = vmatprep.subr.mxu0 0.0
        %378 = vmatpush2.msra.mxu0 0.0
        %379 = vmatprep.subr.mxu0 0.0
        %380 = vmatpush2.msra.mxu0 0.0
        %381 = vmatprep.subr.mxu0 0.0
        %382 = vmatpush2.msra.mxu0 0.0
        %383 = vmatprep.subr.mxu0 0.0
        %384 = vmatpush2.msra.mxu0 0.0
        %385 = vmatprep.subr.mxu0 0.0
        %386 = vmatpush2.msra.mxu0 0.0
        %387 = vmatprep.subr.mxu0 0.0
        %388 = vmatpush2.msra.mxu0 0.0
        %389 = vmatprep.subr.mxu0 0.0
        %390 = vmatpush2.msra.mxu0 0.0
        %391 = vmatprep.subr.mxu0 0.0
        %392 = vmatpush2.msra.mxu0 0.0
        %393 = vmatprep.subr.mxu0 0.0
        %394 = vmatpush2.msra.mxu0 0.0
        %395 = vmatprep.subr.mxu0 0.0
        %396 = vmatpush2.msra.mxu0 0.0
        %397 = vmatprep.subr.mxu0 0.0
        %398 = vmatpush2.msra.mxu0 0.0
        %399 = vmatprep.subr.mxu0 0.0
        %400 = vmatpush2.msra.mxu0 0.0
        %401 = vmatprep.mubr.f32.mxu0 0.0
        %402 = vmatmul.mubr.f32.gmra.mxu0 %v297
        %v403 = vpop.f32.mrf.mxu0
        %v404 = vadd.f32 0.0, %v403
        %v405 = vpop.f32.mrf.mxu0
        %v406 = vadd.f32 0.0, %v405
        %407 = vmatprep.mubr.f32.mxu0 0.0
        %408 = vmatmul.mubr.f32.gmra.mxu0 %v302
        %v409 = vpop.f32.mrf.mxu0
        %v410 = vadd.f32 0.0, %v409
        %v411 = vpop.f32.mrf.mxu0
        %v412 = vadd.f32 0.0, %v411
        %413 = vdwg.mxu0
        %414 = vst [vmem:[%s206] sm:$0xff] %v404
        %415 = vst [vmem:[%s206 + $0x8] sm:$0xff] %v406
        %416 = vst [vmem:[%s206 + $0x10] sm:$0xff] %v410
        %417 = vst [vmem:[%s206 + $0x18] sm:$0xff] %v412
        %s418 = sand.u32 %s113, 1
        %s419 = scalar_lea.sflag [#allocation4], %s418
        %s420 = sand.u32 %s113, 1
        %s421 = smul.addr %s420, 32
        %s422 = scalar_lea.vmem [#allocation5], %s421
        // Predicated region
        $region37: #{tpu_custom_call.1} parent=31 // pred_check
          %p423 = pneg %p123
        $region38: #{tpu_custom_call.1} parent=31 // pred_check_branch
          %425 = sbr.rel (%p423) target = $region40
        $region39: #{tpu_custom_call.1} parent=31 // pred_region
          %s426 = smul.u32 2, %s23
          %s427 = smul.u32 2, %s22
          %s429 = ssub.s32 512, 512
          %430 = vsyncadd %s419, %s429
          %s431 = smul.addr %s426, 2
          %s432 = sadd.s32 %s427, %s431
          %s433 = smul.addr %s432, 128
          %s434 = scalar_lea.hbm %s3, %s433
          %s435 = sshll.u32 %s422, 4
          %s436 = int_to_ptr.vmem [resolvable:$true] %s435
          %441 = dma.vmem_to_hbm [thread:$0]  %s436, 512, %s434, %s419, 256, 256, 16
        $region40: #{tpu_custom_call.1} parent=31 // pred_fallthru
          _
      $region32: #{tpu_custom_call.1} parent=5 // pred_fallthru
        _
      %p442 = scmp.le.s32.totalorder 2, %s13
      // Predicated region
      $region41: #{tpu_custom_call.1} parent=5 // pred_check
        %p443 = pneg %p442
      $region42: #{tpu_custom_call.1} parent=5 // pred_check_branch
        %445 = sbr.rel (%p443) target = $region44
      $region43: #{tpu_custom_call.1} parent=5 // pred_region
        %s446 = ssub.s32 %s13, 2
        // Predicated region
        $region45: #{tpu_custom_call.1} parent=43 // pred_check
          %p447 = pneg %p129
        $region46: #{tpu_custom_call.1} parent=43 // pred_check_branch
          %449 = sbr.rel (%p447) target = $region48
        $region47: #{tpu_custom_call.1} parent=43 // pred_region
          %s450 = sand.u32 %s114, 1
          %s451 = scalar_lea.sflag [#allocation4], %s450
          %s452 = sand.u32 %s114, 1
          %s453 = smul.addr %s452, 32
          %s454 = scalar_lea.vmem [#allocation5], %s453
          %455 = dma.done %s451, 512
        $region48: #{tpu_custom_call.1} parent=43 // pred_fallthru
          _
      $region44: #{tpu_custom_call.1} parent=5 // pred_fallthru
        _
    $region6: #{tpu_custom_call.1} parent=1 // loop_footer
      %s17 = sadd.s32 1, %s13
    $region7: #{tpu_custom_call.1} parent=1 // loop_footer_branch
      %12 = sbr.rel target = $region3
    $region8: #{tpu_custom_call.1} parent=1 // loop_exit
      _
    %456 = vsyncpa [#allocation3], 1
    %s457 = scalar_lea.sflag [#allocation3], 1
    %458 = vsyncpa %s457, 1
    %459 = vsyncpa [#allocation4], 1
    %s460 = scalar_lea.sflag [#allocation4], 1
    %461 = vsyncpa %s460, 1

</llo_original>
